<compile_context>
chip_gen: v5e
topology: v5e:2x2
jax: 0.10.0
libtpu: 0.0.40
codegen_flags: <defaults>
</compile_context>

<pallas_src>
import functools

import jax
import jax.numpy as jnp
from jax.experimental import pallas as pl
from jax.experimental.pallas import tpu as pltpu


def _rbf_tile_kernel(params_ref, out_ref, *, x_step, y_step, tr, tc):
    # params_ref: (B, R, 6)  packed per-RBF coeffs [cx, cy, a00, a11, a01, amp]
    # out_ref   : (B, TR, TC) sigmoid(RBF) image tile (channel dim squeezed)
    r_idx = pl.program_id(1)
    c_idx = pl.program_id(2)

    # In-kernel coordinate synthesis: x varies along lanes, y along sublanes.
    col = jax.lax.broadcasted_iota(jnp.int32, (1, tc), 1).astype(jnp.float32)
    row = jax.lax.broadcasted_iota(jnp.int32, (tr, 1), 0).astype(jnp.float32)
    gx = (col + (c_idx * tc).astype(jnp.float32)) * x_step - 1.0     # (1, TC)
    gy = (row + (r_idx * tr).astype(jnp.float32)) * y_step - 1.0     # (TR, 1)

    params = params_ref[...]                         # (B, R, 6)
    cx  = params[:, :, 0][:, :, None, None]          # (B, R, 1, 1)
    cy  = params[:, :, 1][:, :, None, None]
    a00 = params[:, :, 2][:, :, None, None]          # = -0.5 * cov[..., 0]
    a11 = params[:, :, 3][:, :, None, None]          # = -0.5 * cov[..., 1]
    a01 = params[:, :, 4][:, :, None, None]          # = -1.0 * cov[..., 2]
    amp = params[:, :, 5][:, :, None, None]

    dx = gx[None, None, :, :] - cx                   # (B, R, 1, TC)
    dy = gy[None, None, :, :] - cy                   # (B, R, TR, 1)

    # z = -0.5 * (dx^2*c00 + dy^2*c11 + 2*dx*dy*c01), constants pre-folded and
    # Horner-factored; only the combining ops run at full (B, R, TR, TC) size.
    z = dx * (a00 * dx + a01 * dy) + (a11 * dy) * dy  # (B, R, TR, TC)
    val = amp * jnp.exp(z)                            # exp -> EUP slot
    s = jnp.sum(val, axis=1)                          # (B, TR, TC)

    # NOTE: exact sigmoid keeps tight (1e-5) parity with the reference;
    # pl.reciprocal(..., approx=True) would shave a VPU divide if relaxed.
    out_ref[...] = jax.nn.sigmoid(s)


def _pick_spatial_tiles(rows, cols, num_rbf, budget_bytes=2 << 20):
    """Lane-dense / 8-aligned spatial tiles (or the full dim, always legal),
    shrunk while the per-image (R, TR, TC) f32 temporaries exceed the budget."""
    tc = cols if cols <= 512 else 512
    tr = rows if rows <= 256 else 256

    def fits(tr_, tc_):
        return max(num_rbf, 1) * tr_ * tc_ * 4 <= budget_bytes

    # Halving keeps 8-/128-alignment only when the current tile is a multiple
    # of 16 / 256; otherwise we keep the (legal) full-dim tile.
    while not fits(tr, tc) and tr > 8 and tr % 16 == 0:
        tr //= 2
    while not fits(tr, tc) and tc > 128 and tc % 256 == 0:
        tc //= 2
    return tr, tc


def _pick_image_block(num_images, per_image_bytes, budget_bytes, cap):
    """Largest divisor of num_images that keeps intermediates within budget."""
    b = max(1, min(cap, num_images, budget_bytes // max(per_image_bytes, 1)))
    while num_images % b:
        b -= 1
    return b


def rbf_image_collection_forward(centers, covariances, amplitudes, image_shape):
    """centers: (N, R, 2), covariances: (N, R, 3), amplitudes: (N, R, 1), f32.
    Returns sigmoid RBF images of shape (N, 1, rows, cols), float32."""
    num_images, num_rbf, _ = centers.shape
    rows, cols = image_shape

    # Fold -0.5 / 2.0 into per-RBF coefficients once (tiny (N, R) arrays).
    cx = centers[..., 0]
    cy = centers[..., 1]
    a00 = -0.5 * covariances[..., 0]
    a11 = -0.5 * covariances[..., 1]
    a01 = -covariances[..., 2]
    amp = amplitudes[..., 0]
    params = jnp.stack([cx, cy, a00, a11, a01, amp], axis=-1).astype(jnp.float32)

    # Spatial tiles sized so that R*TR*TC f32 temporaries stay a few MiB.
    tr, tc = _pick_spatial_tiles(rows, cols, num_rbf)

    # Images per grid step: amortize per-step pipeline overhead while keeping
    # the (B, R, TR, TC) f32 intermediates bounded.
    per_image_bytes = max(num_rbf, 1) * tr * tc * 4
    b_img = _pick_image_block(num_images, per_image_bytes, 8 << 20, 64)

    grid = (num_images // b_img, pl.cdiv(rows, tr), pl.cdiv(cols, tc))

    x_step = 2.0 / (cols - 1) if cols > 1 else 0.0
    y_step = 2.0 / (rows - 1) if rows > 1 else 0.0

    # VMEM budget: double-buffered param/output blocks + elementwise temps,
    # with headroom, clamped well below v7x's 64 MiB physical VMEM.
    out_block_bytes = b_img * tr * tc * 4
    param_block_bytes = b_img * max(num_rbf, 8) * 128 * 4        # padded layout
    temp_bytes = 4 * b_img * max(num_rbf, 1) * tr * tc * 4
    vmem_limit = 2 * (out_block_bytes + param_block_bytes) + temp_bytes + (8 << 20)
    vmem_limit = int(min(max(vmem_limit, 32 << 20), 50 << 20))

    kernel = functools.partial(
        _rbf_tile_kernel, x_step=x_step, y_step=y_step, tr=tr, tc=tc)

    return pl.pallas_call(
        kernel,
        out_shape=jax.ShapeDtypeStruct((num_images, 1, rows, cols), jnp.float32),
        grid=grid,
        in_specs=[pl.BlockSpec((b_img, num_rbf, 6), lambda i, r, c: (i, 0, 0))],
        out_specs=pl.BlockSpec((b_img, None, tr, tc), lambda i, r, c: (i, 0, r, c)),
        compiler_params=pltpu.CompilerParams(
            dimension_semantics=("parallel", "parallel", "parallel"),
            vmem_limit_bytes=vmem_limit,
        ),
    )(params)


def _reference_forward(centers, covariances, amplitudes, image_shape):
    """Pure-JAX reference mirroring the PyTorch rbf() math, for verification."""
    rows, cols = image_shape
    x = jnp.linspace(-1.0, 1.0, cols)
    y = jnp.linspace(-1.0, 1.0, rows)
    X, Y = jnp.meshgrid(x, y)
    grid_pts = jnp.stack([X.reshape(-1), Y.reshape(-1)], axis=-1).astype(jnp.float32)

    cov0 = covariances[..., 0][..., None]
    cov1 = covariances[..., 1][..., None]
    cov2 = covariances[..., 2][..., None]
    diff = grid_pts[None, None, :, :] - centers[:, :, None, :]          # (N,R,P,2)
    dx, dy = diff[..., 0], diff[..., 1]
    z = dx * dx * cov0 + dy * dy * cov1 + 2.0 * dx * dy * cov2
    z = jnp.exp(-0.5 * z) * amplitudes
    z = z.sum(axis=1).reshape(centers.shape[0], 1, rows, cols)
    return jax.nn.sigmoid(z)


if __name__ == "__main__":
    key = jax.random.PRNGKey(0)

    # Case 1: module-default small config (mirrors nn.Parameter shapes).
    num_images, num_rbf, image_shape = 2, 8, (16, 16)
    k1, k2, k3, k4, k5, k6 = jax.random.split(key, 6)
    centers = jax.random.normal(k1, (num_images, num_rbf, 2), dtype=jnp.float32)
    covariances = jax.random.uniform(k2, (num_images, num_rbf, 3), dtype=jnp.float32)
    amplitudes = jax.random.normal(k3, (num_images, num_rbf, 1), dtype=jnp.float32)

    out = rbf_image_collection_forward(centers, covariances, amplitudes, image_shape)
    out = jax.block_until_ready(out)
    ref = _reference_forward(centers, covariances, amplitudes, image_shape)
    assert out.shape == (num_images, 1, image_shape[0], image_shape[1]), out.shape
    assert jnp.allclose(out, ref, atol=1e-5, rtol=1e-5), float(jnp.max(jnp.abs(out - ref)))

    # Case 2: non-square image + odd batch (exercises coordinate axes & B pick).
    num_images2, num_rbf2, image_shape2 = 3, 5, (8, 24)
    centers2 = jax.random.normal(k4, (num_images2, num_rbf2, 2), dtype=jnp.float32)
    covariances2 = jax.random.uniform(k5, (num_images2, num_rbf2, 3), dtype=jnp.float32)
    amplitudes2 = jax.random.normal(k6, (num_images2, num_rbf2, 1), dtype=jnp.float32)

    out2 = rbf_image_collection_forward(centers2, covariances2, amplitudes2, image_shape2)
    out2 = jax.block_until_ready(out2)
    ref2 = _reference_forward(centers2, covariances2, amplitudes2, image_shape2)
    assert out2.shape == (num_images2, 1, image_shape2[0], image_shape2[1]), out2.shape
    assert jnp.allclose(out2, ref2, atol=1e-5, rtol=1e-5), float(jnp.max(jnp.abs(out2 - ref2)))

    print("KERNEL_OK")
</pallas_src>

<mosaic_0001>
module attributes {stable_mosaic.version = 11 : i64} {
  func.func @_rbf_tile_kernel(%arg0: i32, %arg1: i32, %arg2: i32, %arg3: memref<2x8x6xf32, #tpu.memory_space<vmem>>, %arg4: memref<2x1x16x16xf32, #tpu.memory_space<vmem>>) attributes {dimension_semantics = [#tpu.dimension_semantics<parallel>, #tpu.dimension_semantics<parallel>, #tpu.dimension_semantics<parallel>], iteration_bounds = array<i64: 1, 1, 1>, scalar_prefetch = 0 : i64, scratch_operands = 0 : i64, tpu.core_type = #tpu.core_type<tc>, window_params = [{transform_indices = @transform_0, window_bounds = array<i64: 2, 8, 6>}, {transform_indices = @transform_1, window_bounds = array<i64: 2, 1, 16, 16>}]} {
    %0 = tpu.iota {dimensions = array<i32: 1>} : vector<1x16xi32>
    %1 = arith.sitofp %0 : vector<1x16xi32> to vector<1x16xf32>
    %2 = tpu.iota {dimensions = array<i32: 0>} : vector<16x1xi32>
    %3 = arith.sitofp %2 : vector<16x1xi32> to vector<16x1xf32>
    %c16_i32 = arith.constant 16 : i32
    %4 = arith.muli %arg2, %c16_i32 : i32
    %5 = arith.sitofp %4 : i32 to f32
    %6 = vector.broadcast %5 : f32 to vector<1x16xf32>
    %7 = arith.addf %1, %6 : vector<1x16xf32>
    %cst = arith.constant 0.13333334 : f32
    %8 = vector.broadcast %cst : f32 to vector<1x16xf32>
    %9 = arith.mulf %7, %8 : vector<1x16xf32>
    %cst_0 = arith.constant 1.000000e+00 : f32
    %10 = vector.broadcast %cst_0 : f32 to vector<1x16xf32>
    %11 = arith.subf %9, %10 : vector<1x16xf32>
    %c16_i32_1 = arith.constant 16 : i32
    %12 = arith.muli %arg1, %c16_i32_1 : i32
    %13 = arith.sitofp %12 : i32 to f32
    %14 = vector.broadcast %13 : f32 to vector<16x1xf32>
    %15 = arith.addf %3, %14 : vector<16x1xf32>
    %cst_2 = arith.constant 0.13333334 : f32
    %16 = vector.broadcast %cst_2 : f32 to vector<16x1xf32>
    %17 = arith.mulf %15, %16 : vector<16x1xf32>
    %cst_3 = arith.constant 1.000000e+00 : f32
    %18 = vector.broadcast %cst_3 : f32 to vector<16x1xf32>
    %19 = arith.subf %17, %18 : vector<16x1xf32>
    %c0 = arith.constant 0 : index
    %c0_4 = arith.constant 0 : index
    %c0_5 = arith.constant 0 : index
    %20 = vector.load %arg3[%c0, %c0_4, %c0_5] : memref<2x8x6xf32, #tpu.memory_space<vmem>>, vector<2x8x6xf32>
    %21 = vector.extract_strided_slice %20 {offsets = [0, 0, 0], sizes = [2, 8, 1], strides = [1, 1, 1]} : vector<2x8x6xf32> to vector<2x8x1xf32>
    %22 = vector.shape_cast %21 : vector<2x8x1xf32> to vector<2x8xf32>
    %23 = vector.shape_cast %22 : vector<2x8xf32> to vector<2x8x1x1xf32>
    %24 = vector.extract_strided_slice %20 {offsets = [0, 0, 1], sizes = [2, 8, 1], strides = [1, 1, 1]} : vector<2x8x6xf32> to vector<2x8x1xf32>
    %25 = vector.shape_cast %24 : vector<2x8x1xf32> to vector<2x8xf32>
    %26 = vector.shape_cast %25 : vector<2x8xf32> to vector<2x8x1x1xf32>
    %27 = vector.extract_strided_slice %20 {offsets = [0, 0, 2], sizes = [2, 8, 1], strides = [1, 1, 1]} : vector<2x8x6xf32> to vector<2x8x1xf32>
    %28 = vector.shape_cast %27 : vector<2x8x1xf32> to vector<2x8xf32>
    %29 = vector.shape_cast %28 : vector<2x8xf32> to vector<2x8x1x1xf32>
    %30 = vector.extract_strided_slice %20 {offsets = [0, 0, 3], sizes = [2, 8, 1], strides = [1, 1, 1]} : vector<2x8x6xf32> to vector<2x8x1xf32>
    %31 = vector.shape_cast %30 : vector<2x8x1xf32> to vector<2x8xf32>
    %32 = vector.shape_cast %31 : vector<2x8xf32> to vector<2x8x1x1xf32>
    %33 = vector.extract_strided_slice %20 {offsets = [0, 0, 4], sizes = [2, 8, 1], strides = [1, 1, 1]} : vector<2x8x6xf32> to vector<2x8x1xf32>
    %34 = vector.shape_cast %33 : vector<2x8x1xf32> to vector<2x8xf32>
    %35 = vector.shape_cast %34 : vector<2x8xf32> to vector<2x8x1x1xf32>
    %36 = vector.extract_strided_slice %20 {offsets = [0, 0, 5], sizes = [2, 8, 1], strides = [1, 1, 1]} : vector<2x8x6xf32> to vector<2x8x1xf32>
    %37 = vector.shape_cast %36 : vector<2x8x1xf32> to vector<2x8xf32>
    %38 = vector.shape_cast %37 : vector<2x8xf32> to vector<2x8x1x1xf32>
    %39 = vector.shape_cast %11 : vector<1x16xf32> to vector<1x1x1x16xf32>
    %40 = vector.broadcast %39 : vector<1x1x1x16xf32> to vector<2x8x1x16xf32>
    %41 = vector.broadcast %23 : vector<2x8x1x1xf32> to vector<2x8x1x16xf32>
    %42 = arith.subf %40, %41 : vector<2x8x1x16xf32>
    %43 = vector.shape_cast %19 : vector<16x1xf32> to vector<1x1x16x1xf32>
    %44 = vector.broadcast %43 : vector<1x1x16x1xf32> to vector<2x8x16x1xf32>
    %45 = vector.broadcast %26 : vector<2x8x1x1xf32> to vector<2x8x16x1xf32>
    %46 = arith.subf %44, %45 : vector<2x8x16x1xf32>
    %47 = vector.broadcast %29 : vector<2x8x1x1xf32> to vector<2x8x1x16xf32>
    %48 = arith.mulf %47, %42 : vector<2x8x1x16xf32>
    %49 = vector.broadcast %35 : vector<2x8x1x1xf32> to vector<2x8x16x1xf32>
    %50 = arith.mulf %49, %46 : vector<2x8x16x1xf32>
    %51 = vector.broadcast %48 : vector<2x8x1x16xf32> to vector<2x8x16x16xf32>
    %52 = vector.broadcast %50 : vector<2x8x16x1xf32> to vector<2x8x16x16xf32>
    %53 = arith.addf %51, %52 : vector<2x8x16x16xf32>
    %54 = vector.broadcast %42 : vector<2x8x1x16xf32> to vector<2x8x16x16xf32>
    %55 = arith.mulf %54, %53 : vector<2x8x16x16xf32>
    %56 = vector.broadcast %32 : vector<2x8x1x1xf32> to vector<2x8x16x1xf32>
    %57 = arith.mulf %56, %46 : vector<2x8x16x1xf32>
    %58 = arith.mulf %57, %46 : vector<2x8x16x1xf32>
    %59 = vector.broadcast %58 : vector<2x8x16x1xf32> to vector<2x8x16x16xf32>
    %60 = arith.addf %55, %59 : vector<2x8x16x16xf32>
    %61 = math.exp %60 : vector<2x8x16x16xf32>
    %62 = vector.broadcast %38 : vector<2x8x1x1xf32> to vector<2x8x16x16xf32>
    %63 = arith.mulf %62, %61 : vector<2x8x16x16xf32>
    %cst_6 = arith.constant dense<0.000000e+00> : vector<2x16x16xf32>
    %64 = vector.multi_reduction <add>, %63, %cst_6 [1] : vector<2x8x16x16xf32> to vector<2x16x16xf32>
    %65 = arith.negf %64 : vector<2x16x16xf32>
    %66 = math.exp %65 : vector<2x16x16xf32>
    %cst_7 = arith.constant 1.000000e+00 : f32
    %67 = vector.broadcast %cst_7 : f32 to vector<2x16x16xf32>
    %68 = arith.addf %67, %66 : vector<2x16x16xf32>
    %69 = arith.divf %67, %68 : vector<2x16x16xf32>
    %c0_8 = arith.constant 0 : index
    %c0_9 = arith.constant 0 : index
    %c0_10 = arith.constant 0 : index
    %c0_11 = arith.constant 0 : index
    %70 = vector.load %arg4[%c0_8, %c0_9, %c0_10, %c0_11] : memref<2x1x16x16xf32, #tpu.memory_space<vmem>>, vector<2x1x16x16xf32>
    %71 = vector.shape_cast %70 : vector<2x1x16x16xf32> to vector<2x16x16xf32>
    %72 = vector.shape_cast %69 : vector<2x16x16xf32> to vector<2x1x16x16xf32>
    tpu.vector_store %arg4[%c0_8, %c0_9, %c0_10, %c0_11], %72 {strides = array<i32>} : memref<2x1x16x16xf32, #tpu.memory_space<vmem>>, vector<2x1x16x16xf32>,
    return
  }
  func.func @transform_0(%arg0: i32, %arg1: i32, %arg2: i32) -> (i32, i32, i32) {
    %c0_i32 = arith.constant 0 : i32
    %c0_i32_0 = arith.constant 0 : i32
    %c0_i32_1 = arith.constant 0 : i32
    return %arg0, %c0_i32, %c0_i32_0 : i32, i32, i32
  }
  func.func @transform_1(%arg0: i32, %arg1: i32, %arg2: i32) -> (i32, i32, i32, i32) {
    %c0_i32 = arith.constant 0 : i32
    %c0_i32_0 = arith.constant 0 : i32
    return %arg0, %c0_i32, %arg1, %arg2 : i32, i32, i32, i32
  }
}

</mosaic_0001>

<llo_original>
// kernel: tpu_custom_call.1
$region0: #{tpu_custom_call.1}
  #allocation0 [shape = 'u32[]', space=smem, size = 0x4, offset = 0x4, fixed_abs, tag = 'smem constant byte address 0x4 - core index']
  #allocation1 [shape = 'u32[72,128]{1,0:T(1,128)}', space=vmem, size = 0x9000, scoped, tag = 'internal scratch']
  %s0 = inlined_call_operand.vmem [shape: f32[2,8,6], index: 0, kind: input, shape index: {}]
  %s1 = inlined_call_operand.hbm [shape: f32[2,1,16,16], index: 1, kind: output, shape index: {}]
  %s2 = sld [smem:[#allocation0]]
  $region14: #{tpu_custom_call.1} parent=0
    _
  %s4 = ssub.s32 1, %s2
  %s5 = scalar_select 0, %s4, %s2
  $region1: #{tpu_custom_call.1} parent=0
    #allocation2 [shape = 'u8[16384]{0}', space=vmem, size = 0x4000, scoped, tag = 'output window, operand 0, single buffered']
    #allocation3 [shape = 's32[1]{0}', space=sflag, size = 0x4, scoped, tag = 'scoped memory for tpu_custom_call.1']
    %6 = vsyncpa [#allocation3], 0
    // Predicated region
    $region2: #{tpu_custom_call.1} parent=1 // pred_check
      _
    $region3: #{tpu_custom_call.1} parent=1 // pred_check_branch
      %8 = sbr.rel (0) target = $region5
    $region4: #{tpu_custom_call.1} parent=1 // pred_region
      _
    $region5: #{tpu_custom_call.1} parent=1 // pred_fallthru
      _
    %v9 = vlaneseq
    %v10 = vand.u32 %v9, 127
    %v11 = vcvt.s32.f32 %v10
    %v12 = vlaneseq
    %v13 = vshrl.u32 %v12, 7
    %v14 = vadd.s32 %v13, 8
    %v15 = vcvt.s32.f32 %v13
    %v16 = vcvt.s32.f32 %v14
    %s17 = smul.u32 0, 16
    %s18 = scvt.s32.f32 %s17
    %v19 = vstv %s18
    %v20 = vadd.f32 %v11, %v19
    %v21 = vmul.f32 %v20, 0.13333334
    %v22 = vsub.f32 %v21, 1.0
    %s23 = smul.u32 0, 16
    %s24 = scvt.s32.f32 %s23
    %v25 = vstv %s24
    %v26 = vadd.f32 %v15, %v25
    %v27 = vadd.f32 %v16, %v25
    %v28 = vmul.f32 %v26, 0.13333334
    %v29 = vmul.f32 %v27, 0.13333334
    %v30 = vsub.f32 %v28, 1.0
    %v31 = vsub.f32 %v29, 1.0
    %v32 = vld [vmem:[%s0] sm:$0xff]
    %v33 = vld [vmem:[%s0 + $0x8] sm:$0xff]
    %v36 = vrot.slane %v32, 1
    %v37 = vrot.slane %v32, 2
    %v38 = vrot.slane %v32, 3
    %v39 = vrot.slane %v32, 4
    %v40 = vrot.slane %v32, 5
    %v41 = vrot.slane %v32, 6
    %v42 = vrot.slane %v32, 7
    %v43 = vrot.slane %v33, 1
    %v44 = vrot.slane %v33, 2
    %v45 = vrot.slane %v33, 3
    %v46 = vrot.slane %v33, 4
    %v47 = vrot.slane %v33, 5
    %v48 = vrot.slane %v33, 6
    %v49 = vrot.slane %v33, 7
    %50 = vset.pattern.permute.xlu0 0
    %51 = vperm.xlu0 %50, %v32
    %v52 = vpop.permute.xlu0 %51
    %v54 = vperm.slane %v52, 0
    %55 = vset.pattern.permute.xlu0 0
    %56 = vperm.xlu0 %55, %v36
    %v57 = vpop.permute.xlu0 %56
    %v59 = vperm.slane %v57, 0
    %60 = vset.pattern.permute.xlu0 0
    %61 = vperm.xlu0 %60, %v37
    %v62 = vpop.permute.xlu0 %61
    %v64 = vperm.slane %v62, 0
    %65 = vset.pattern.permute.xlu0 0
    %66 = vperm.xlu0 %65, %v38
    %v67 = vpop.permute.xlu0 %66
    %v69 = vperm.slane %v67, 0
    %70 = vset.pattern.permute.xlu0 0
    %71 = vperm.xlu0 %70, %v39
    %v72 = vpop.permute.xlu0 %71
    %v74 = vperm.slane %v72, 0
    %75 = vset.pattern.permute.xlu0 0
    %76 = vperm.xlu0 %75, %v40
    %v77 = vpop.permute.xlu0 %76
    %v79 = vperm.slane %v77, 0
    %80 = vset.pattern.permute.xlu0 0
    %81 = vperm.xlu0 %80, %v41
    %v82 = vpop.permute.xlu0 %81
    %v84 = vperm.slane %v82, 0
    %85 = vset.pattern.permute.xlu0 0
    %86 = vperm.xlu0 %85, %v42
    %v87 = vpop.permute.xlu0 %86
    %v89 = vperm.slane %v87, 0
    %90 = vset.pattern.permute.xlu0 0
    %91 = vperm.xlu0 %90, %v33
    %v92 = vpop.permute.xlu0 %91
    %v94 = vperm.slane %v92, 0
    %95 = vset.pattern.permute.xlu0 0
    %96 = vperm.xlu0 %95, %v43
    %v97 = vpop.permute.xlu0 %96
    %v99 = vperm.slane %v97, 0
    %100 = vset.pattern.permute.xlu0 0
    %101 = vperm.xlu0 %100, %v44
    %v102 = vpop.permute.xlu0 %101
    %v104 = vperm.slane %v102, 0
    %105 = vset.pattern.permute.xlu0 0
    %106 = vperm.xlu0 %105, %v45
    %v107 = vpop.permute.xlu0 %106
    %v109 = vperm.slane %v107, 0
    %110 = vset.pattern.permute.xlu0 0
    %111 = vperm.xlu0 %110, %v46
    %v112 = vpop.permute.xlu0 %111
    %v114 = vperm.slane %v112, 0
    %115 = vset.pattern.permute.xlu0 0
    %116 = vperm.xlu0 %115, %v47
    %v117 = vpop.permute.xlu0 %116
    %v119 = vperm.slane %v117, 0
    %120 = vset.pattern.permute.xlu0 0
    %121 = vperm.xlu0 %120, %v48
    %v122 = vpop.permute.xlu0 %121
    %v124 = vperm.slane %v122, 0
    %125 = vset.pattern.permute.xlu0 0
    %126 = vperm.xlu0 %125, %v49
    %v127 = vpop.permute.xlu0 %126
    %v129 = vperm.slane %v127, 0
    %v130 = vsub.f32 %v22, %v54
    %v131 = vsub.f32 %v22, %v59
    %v132 = vsub.f32 %v22, %v64
    %v133 = vsub.f32 %v22, %v69
    %v134 = vsub.f32 %v22, %v74
    %v135 = vsub.f32 %v22, %v79
    %v136 = vsub.f32 %v22, %v84
    %v137 = vsub.f32 %v22, %v89
    %v138 = vsub.f32 %v22, %v94
    %v139 = vsub.f32 %v22, %v99
    %v140 = vsub.f32 %v22, %v104
    %v141 = vsub.f32 %v22, %v109
    %v142 = vsub.f32 %v22, %v114
    %v143 = vsub.f32 %v22, %v119
    %v144 = vsub.f32 %v22, %v124
    %v145 = vsub.f32 %v22, %v129
    %v146 = vperm.slane %v32, 0
    %v147 = vperm.slane %v36, 0
    %v148 = vperm.slane %v37, 0
    %v149 = vperm.slane %v38, 0
    %v150 = vperm.slane %v39, 0
    %v151 = vperm.slane %v40, 0
    %v152 = vperm.slane %v41, 0
    %v153 = vperm.slane %v42, 0
    %v154 = vperm.slane %v33, 0
    %v155 = vperm.slane %v43, 0
    %v156 = vperm.slane %v44, 0
    %v157 = vperm.slane %v45, 0
    %v158 = vperm.slane %v46, 0
    %v159 = vperm.slane %v47, 0
    %v160 = vperm.slane %v48, 0
    %v161 = vperm.slane %v49, 0
    %v178 = vsub.f32 %v30, %v146
    %v179 = vsub.f32 %v31, %v146
    %v180 = vsub.f32 %v30, %v147
    %v181 = vsub.f32 %v31, %v147
    %v182 = vsub.f32 %v30, %v148
    %v183 = vsub.f32 %v31, %v148
    %v184 = vsub.f32 %v30, %v149
    %v185 = vsub.f32 %v31, %v149
    %v186 = vsub.f32 %v30, %v150
    %v187 = vsub.f32 %v31, %v150
    %v188 = vsub.f32 %v30, %v151
    %v189 = vsub.f32 %v31, %v151
    %v190 = vsub.f32 %v30, %v152
    %v191 = vsub.f32 %v31, %v152
    %v192 = vsub.f32 %v30, %v153
    %v193 = vsub.f32 %v31, %v153
    %v194 = vsub.f32 %v30, %v154
    %v195 = vsub.f32 %v31, %v154
    %v196 = vsub.f32 %v30, %v155
    %v197 = vsub.f32 %v31, %v155
    %v198 = vsub.f32 %v30, %v156
    %v199 = vsub.f32 %v31, %v156
    %v200 = vsub.f32 %v30, %v157
    %v201 = vsub.f32 %v31, %v157
    %v202 = vsub.f32 %v30, %v158
    %v203 = vsub.f32 %v31, %v158
    %v204 = vsub.f32 %v30, %v159
    %v205 = vsub.f32 %v31, %v159
    %v206 = vsub.f32 %v30, %v160
    %v207 = vsub.f32 %v31, %v160
    %v208 = vsub.f32 %v30, %v161
    %v209 = vsub.f32 %v31, %v161
    %210 = vset.pattern.permute.xlu0 2
    %211 = vperm.xlu0 %210, %v32
    %v212 = vpop.permute.xlu0 %211
    %v214 = vperm.slane %v212, 0
    %215 = vset.pattern.permute.xlu0 2
    %216 = vperm.xlu0 %215, %v36
    %v217 = vpop.permute.xlu0 %216
    %v219 = vperm.slane %v217, 0
    %220 = vset.pattern.permute.xlu0 2
    %221 = vperm.xlu0 %220, %v37
    %v222 = vpop.permute.xlu0 %221
    %v224 = vperm.slane %v222, 0
    %225 = vset.pattern.permute.xlu0 2
    %226 = vperm.xlu0 %225, %v38
    %v227 = vpop.permute.xlu0 %226
    %v229 = vperm.slane %v227, 0
    %230 = vset.pattern.permute.xlu0 2
    %231 = vperm.xlu0 %230, %v39
    %v232 = vpop.permute.xlu0 %231
    %v234 = vperm.slane %v232, 0
    %235 = vset.pattern.permute.xlu0 2
    %236 = vperm.xlu0 %235, %v40
    %v237 = vpop.permute.xlu0 %236
    %v239 = vperm.slane %v237, 0
    %240 = vset.pattern.permute.xlu0 2
    %241 = vperm.xlu0 %240, %v41
    %v242 = vpop.permute.xlu0 %241
    %v244 = vperm.slane %v242, 0
    %245 = vset.pattern.permute.xlu0 2
    %246 = vperm.xlu0 %245, %v42
    %v247 = vpop.permute.xlu0 %246
    %v249 = vperm.slane %v247, 0
    %250 = vset.pattern.permute.xlu0 2
    %251 = vperm.xlu0 %250, %v33
    %v252 = vpop.permute.xlu0 %251
    %v254 = vperm.slane %v252, 0
    %255 = vset.pattern.permute.xlu0 2
    %256 = vperm.xlu0 %255, %v43
    %v257 = vpop.permute.xlu0 %256
    %v259 = vperm.slane %v257, 0
    %260 = vset.pattern.permute.xlu0 2
    %261 = vperm.xlu0 %260, %v44
    %v262 = vpop.permute.xlu0 %261
    %v264 = vperm.slane %v262, 0
    %265 = vset.pattern.permute.xlu0 2
    %266 = vperm.xlu0 %265, %v45
    %v267 = vpop.permute.xlu0 %266
    %v269 = vperm.slane %v267, 0
    %270 = vset.pattern.permute.xlu0 2
    %271 = vperm.xlu0 %270, %v46
    %v272 = vpop.permute.xlu0 %271
    %v274 = vperm.slane %v272, 0
    %275 = vset.pattern.permute.xlu0 2
    %276 = vperm.xlu0 %275, %v47
    %v277 = vpop.permute.xlu0 %276
    %v279 = vperm.slane %v277, 0
    %280 = vset.pattern.permute.xlu0 2
    %281 = vperm.xlu0 %280, %v48
    %v282 = vpop.permute.xlu0 %281
    %v284 = vperm.slane %v282, 0
    %285 = vset.pattern.permute.xlu0 2
    %286 = vperm.xlu0 %285, %v49
    %v287 = vpop.permute.xlu0 %286
    %v289 = vperm.slane %v287, 0
    %v290 = vmul.f32 %v214, %v130
    %v291 = vmul.f32 %v219, %v131
    %v292 = vmul.f32 %v224, %v132
    %v293 = vmul.f32 %v229, %v133
    %v294 = vmul.f32 %v234, %v134
    %v295 = vmul.f32 %v239, %v135
    %v296 = vmul.f32 %v244, %v136
    %v297 = vmul.f32 %v249, %v137
    %v298 = vmul.f32 %v254, %v138
    %v299 = vmul.f32 %v259, %v139
    %v300 = vmul.f32 %v264, %v140
    %v301 = vmul.f32 %v269, %v141
    %v302 = vmul.f32 %v274, %v142
    %v303 = vmul.f32 %v279, %v143
    %v304 = vmul.f32 %v284, %v144
    %v305 = vmul.f32 %v289, %v145
    %338 = vrot.lane.b32.xlu0 %v178, 3
    %v339 = vpop.permute.xlu0 %338
    %340 = vrot.lane.b32.xlu0 %v179, 3
    %v341 = vpop.permute.xlu0 %340
    %342 = vrot.lane.b32.xlu0 %v180, 3
    %v343 = vpop.permute.xlu0 %342
    %344 = vrot.lane.b32.xlu0 %v181, 3
    %v345 = vpop.permute.xlu0 %344
    %346 = vrot.lane.b32.xlu0 %v182, 3
    %v347 = vpop.permute.xlu0 %346
    %348 = vrot.lane.b32.xlu0 %v183, 3
    %v349 = vpop.permute.xlu0 %348
    %350 = vrot.lane.b32.xlu0 %v184, 3
    %v351 = vpop.permute.xlu0 %350
    %352 = vrot.lane.b32.xlu0 %v185, 3
    %v353 = vpop.permute.xlu0 %352
    %354 = vrot.lane.b32.xlu0 %v186, 3
    %v355 = vpop.permute.xlu0 %354
    %356 = vrot.lane.b32.xlu0 %v187, 3
    %v357 = vpop.permute.xlu0 %356
    %358 = vrot.lane.b32.xlu0 %v188, 3
    %v359 = vpop.permute.xlu0 %358
    %360 = vrot.lane.b32.xlu0 %v189, 3
    %v361 = vpop.permute.xlu0 %360
    %362 = vrot.lane.b32.xlu0 %v190, 3
    %v363 = vpop.permute.xlu0 %362
    %364 = vrot.lane.b32.xlu0 %v191, 3
    %v365 = vpop.permute.xlu0 %364
    %366 = vrot.lane.b32.xlu0 %v192, 3
    %v367 = vpop.permute.xlu0 %366
    %368 = vrot.lane.b32.xlu0 %v193, 3
    %v369 = vpop.permute.xlu0 %368
    %370 = vrot.lane.b32.xlu0 %v194, 3
    %v371 = vpop.permute.xlu0 %370
    %372 = vrot.lane.b32.xlu0 %v195, 3
    %v373 = vpop.permute.xlu0 %372
    %374 = vrot.lane.b32.xlu0 %v196, 3
    %v375 = vpop.permute.xlu0 %374
    %376 = vrot.lane.b32.xlu0 %v197, 3
    %v377 = vpop.permute.xlu0 %376
    %378 = vrot.lane.b32.xlu0 %v198, 3
    %v379 = vpop.permute.xlu0 %378
    %380 = vrot.lane.b32.xlu0 %v199, 3
    %v381 = vpop.permute.xlu0 %380
    %382 = vrot.lane.b32.xlu0 %v200, 3
    %v383 = vpop.permute.xlu0 %382
    %384 = vrot.lane.b32.xlu0 %v201, 3
    %v385 = vpop.permute.xlu0 %384
    %386 = vrot.lane.b32.xlu0 %v202, 3
    %v387 = vpop.permute.xlu0 %386
    %388 = vrot.lane.b32.xlu0 %v203, 3
    %v389 = vpop.permute.xlu0 %388
    %390 = vrot.lane.b32.xlu0 %v204, 3
    %v391 = vpop.permute.xlu0 %390
    %392 = vrot.lane.b32.xlu0 %v205, 3
    %v393 = vpop.permute.xlu0 %392
    %394 = vrot.lane.b32.xlu0 %v206, 3
    %v395 = vpop.permute.xlu0 %394
    %396 = vrot.lane.b32.xlu0 %v207, 3
    %v397 = vpop.permute.xlu0 %396
    %398 = vrot.lane.b32.xlu0 %v208, 3
    %v399 = vpop.permute.xlu0 %398
    %400 = vrot.lane.b32.xlu0 %v209, 3
    %v401 = vpop.permute.xlu0 %400
    %v434 = vmul.f32 %v146, %v339
    %v435 = vmul.f32 %v146, %v341
    %v436 = vmul.f32 %v147, %v343
    %v437 = vmul.f32 %v147, %v345
    %v438 = vmul.f32 %v148, %v347
    %v439 = vmul.f32 %v148, %v349
    %v440 = vmul.f32 %v149, %v351
    %v441 = vmul.f32 %v149, %v353
    %v442 = vmul.f32 %v150, %v355
    %v443 = vmul.f32 %v150, %v357
    %v444 = vmul.f32 %v151, %v359
    %v445 = vmul.f32 %v151, %v361
    %v446 = vmul.f32 %v152, %v363
    %v447 = vmul.f32 %v152, %v365
    %v448 = vmul.f32 %v153, %v367
    %v449 = vmul.f32 %v153, %v369
    %v450 = vmul.f32 %v154, %v371
    %v451 = vmul.f32 %v154, %v373
    %v452 = vmul.f32 %v155, %v375
    %v453 = vmul.f32 %v155, %v377
    %v454 = vmul.f32 %v156, %v379
    %v455 = vmul.f32 %v156, %v381
    %v456 = vmul.f32 %v157, %v383
    %v457 = vmul.f32 %v157, %v385
    %v458 = vmul.f32 %v158, %v387
    %v459 = vmul.f32 %v158, %v389
    %v460 = vmul.f32 %v159, %v391
    %v461 = vmul.f32 %v159, %v393
    %v462 = vmul.f32 %v160, %v395
    %v463 = vmul.f32 %v160, %v397
    %v464 = vmul.f32 %v161, %v399
    %v465 = vmul.f32 %v161, %v401
    %467 = vset.pattern.permute.xlu0 4
    %468 = vperm.xlu0 %467, %v434
    %v469 = vpop.permute.xlu0 %468
    %472 = vset.pattern.permute.xlu0 4
    %473 = vperm.xlu0 %472, %v435
    %v474 = vpop.permute.xlu0 %473
    %477 = vset.pattern.permute.xlu0 4
    %478 = vperm.xlu0 %477, %v436
    %v479 = vpop.permute.xlu0 %478
    %482 = vset.pattern.permute.xlu0 4
    %483 = vperm.xlu0 %482, %v437
    %v484 = vpop.permute.xlu0 %483
    %487 = vset.pattern.permute.xlu0 4
    %488 = vperm.xlu0 %487, %v438
    %v489 = vpop.permute.xlu0 %488
    %492 = vset.pattern.permute.xlu0 4
    %493 = vperm.xlu0 %492, %v439
    %v494 = vpop.permute.xlu0 %493
    %497 = vset.pattern.permute.xlu0 4
    %498 = vperm.xlu0 %497, %v440
    %v499 = vpop.permute.xlu0 %498
    %502 = vset.pattern.permute.xlu0 4
    %503 = vperm.xlu0 %502, %v441
    %v504 = vpop.permute.xlu0 %503
    %507 = vset.pattern.permute.xlu0 4
    %508 = vperm.xlu0 %507, %v442
    %v509 = vpop.permute.xlu0 %508
    %512 = vset.pattern.permute.xlu0 4
    %513 = vperm.xlu0 %512, %v443
    %v514 = vpop.permute.xlu0 %513
    %517 = vset.pattern.permute.xlu0 4
    %518 = vperm.xlu0 %517, %v444
    %v519 = vpop.permute.xlu0 %518
    %522 = vset.pattern.permute.xlu0 4
    %523 = vperm.xlu0 %522, %v445
    %v524 = vpop.permute.xlu0 %523
    %527 = vset.pattern.permute.xlu0 4
    %528 = vperm.xlu0 %527, %v446
    %v529 = vpop.permute.xlu0 %528
    %532 = vset.pattern.permute.xlu0 4
    %533 = vperm.xlu0 %532, %v447
    %v534 = vpop.permute.xlu0 %533
    %537 = vset.pattern.permute.xlu0 4
    %538 = vperm.xlu0 %537, %v448
    %v539 = vpop.permute.xlu0 %538
    %542 = vset.pattern.permute.xlu0 4
    %543 = vperm.xlu0 %542, %v449
    %v544 = vpop.permute.xlu0 %543
    %547 = vset.pattern.permute.xlu0 4
    %548 = vperm.xlu0 %547, %v450
    %v549 = vpop.permute.xlu0 %548
    %552 = vset.pattern.permute.xlu0 4
    %553 = vperm.xlu0 %552, %v451
    %v554 = vpop.permute.xlu0 %553
    %557 = vset.pattern.permute.xlu0 4
    %558 = vperm.xlu0 %557, %v452
    %v559 = vpop.permute.xlu0 %558
    %562 = vset.pattern.permute.xlu0 4
    %563 = vperm.xlu0 %562, %v453
    %v564 = vpop.permute.xlu0 %563
    %567 = vset.pattern.permute.xlu0 4
    %568 = vperm.xlu0 %567, %v454
    %v569 = vpop.permute.xlu0 %568
    %572 = vset.pattern.permute.xlu0 4
    %573 = vperm.xlu0 %572, %v455
    %v574 = vpop.permute.xlu0 %573
    %577 = vset.pattern.permute.xlu0 4
    %578 = vperm.xlu0 %577, %v456
    %v579 = vpop.permute.xlu0 %578
    %582 = vset.pattern.permute.xlu0 4
    %583 = vperm.xlu0 %582, %v457
    %v584 = vpop.permute.xlu0 %583
    %587 = vset.pattern.permute.xlu0 4
    %588 = vperm.xlu0 %587, %v458
    %v589 = vpop.permute.xlu0 %588
    %592 = vset.pattern.permute.xlu0 4
    %593 = vperm.xlu0 %592, %v459
    %v594 = vpop.permute.xlu0 %593
    %597 = vset.pattern.permute.xlu0 4
    %598 = vperm.xlu0 %597, %v460
    %v599 = vpop.permute.xlu0 %598
    %602 = vset.pattern.permute.xlu0 4
    %603 = vperm.xlu0 %602, %v461
    %v604 = vpop.permute.xlu0 %603
    %607 = vset.pattern.permute.xlu0 4
    %608 = vperm.xlu0 %607, %v462
    %v609 = vpop.permute.xlu0 %608
    %612 = vset.pattern.permute.xlu0 4
    %613 = vperm.xlu0 %612, %v463
    %v614 = vpop.permute.xlu0 %613
    %617 = vset.pattern.permute.xlu0 4
    %618 = vperm.xlu0 %617, %v464
    %v619 = vpop.permute.xlu0 %618
    %622 = vset.pattern.permute.xlu0 4
    %623 = vperm.xlu0 %622, %v465
    %v624 = vpop.permute.xlu0 %623
    %v626 = vadd.f32 %v290, %v469
    %v627 = vadd.f32 %v290, %v474
    %v628 = vadd.f32 %v291, %v479
    %v629 = vadd.f32 %v291, %v484
    %v630 = vadd.f32 %v292, %v489
    %v631 = vadd.f32 %v292, %v494
    %v632 = vadd.f32 %v293, %v499
    %v633 = vadd.f32 %v293, %v504
    %v634 = vadd.f32 %v294, %v509
    %v635 = vadd.f32 %v294, %v514
    %v636 = vadd.f32 %v295, %v519
    %v637 = vadd.f32 %v295, %v524
    %v638 = vadd.f32 %v296, %v529
    %v639 = vadd.f32 %v296, %v534
    %v640 = vadd.f32 %v297, %v539
    %v641 = vadd.f32 %v297, %v544
    %v642 = vadd.f32 %v298, %v549
    %v643 = vadd.f32 %v298, %v554
    %v644 = vadd.f32 %v299, %v559
    %v645 = vadd.f32 %v299, %v564
    %v646 = vadd.f32 %v300, %v569
    %v647 = vadd.f32 %v300, %v574
    %v648 = vadd.f32 %v301, %v579
    %v649 = vadd.f32 %v301, %v584
    %v650 = vadd.f32 %v302, %v589
    %v651 = vadd.f32 %v302, %v594
    %v652 = vadd.f32 %v303, %v599
    %v653 = vadd.f32 %v303, %v604
    %v654 = vadd.f32 %v304, %v609
    %v655 = vadd.f32 %v304, %v614
    %v656 = vadd.f32 %v305, %v619
    %v657 = vadd.f32 %v305, %v624
    %v658 = vmul.f32 %v130, %v626
    %v659 = vmul.f32 %v130, %v627
    %v660 = vmul.f32 %v131, %v628
    %v661 = vmul.f32 %v131, %v629
    %v662 = vmul.f32 %v132, %v630
    %v663 = vmul.f32 %v132, %v631
    %v664 = vmul.f32 %v133, %v632
    %v665 = vmul.f32 %v133, %v633
    %v666 = vmul.f32 %v134, %v634
    %v667 = vmul.f32 %v134, %v635
    %v668 = vmul.f32 %v135, %v636
    %v669 = vmul.f32 %v135, %v637
    %v670 = vmul.f32 %v136, %v638
    %v671 = vmul.f32 %v136, %v639
    %v672 = vmul.f32 %v137, %v640
    %v673 = vmul.f32 %v137, %v641
    %v674 = vmul.f32 %v138, %v642
    %v675 = vmul.f32 %v138, %v643
    %v676 = vmul.f32 %v139, %v644
    %v677 = vmul.f32 %v139, %v645
    %v678 = vmul.f32 %v140, %v646
    %v679 = vmul.f32 %v140, %v647
    %v680 = vmul.f32 %v141, %v648
    %v681 = vmul.f32 %v141, %v649
    %v682 = vmul.f32 %v142, %v650
    %v683 = vmul.f32 %v142, %v651
    %v684 = vmul.f32 %v143, %v652
    %v685 = vmul.f32 %v143, %v653
    %v686 = vmul.f32 %v144, %v654
    %v687 = vmul.f32 %v144, %v655
    %v688 = vmul.f32 %v145, %v656
    %v689 = vmul.f32 %v145, %v657
    %690 = vrot.lane.b32.xlu0 %v178, 2
    %v691 = vpop.permute.xlu0 %690
    %692 = vrot.lane.b32.xlu0 %v179, 2
    %v693 = vpop.permute.xlu0 %692
    %694 = vrot.lane.b32.xlu0 %v180, 2
    %v695 = vpop.permute.xlu0 %694
    %696 = vrot.lane.b32.xlu0 %v181, 2
    %v697 = vpop.permute.xlu0 %696
    %698 = vrot.lane.b32.xlu0 %v182, 2
    %v699 = vpop.permute.xlu0 %698
    %700 = vrot.lane.b32.xlu0 %v183, 2
    %v701 = vpop.permute.xlu0 %700
    %702 = vrot.lane.b32.xlu0 %v184, 2
    %v703 = vpop.permute.xlu0 %702
    %704 = vrot.lane.b32.xlu0 %v185, 2
    %v705 = vpop.permute.xlu0 %704
    %706 = vrot.lane.b32.xlu0 %v186, 2
    %v707 = vpop.permute.xlu0 %706
    %708 = vrot.lane.b32.xlu0 %v187, 2
    %v709 = vpop.permute.xlu0 %708
    %710 = vrot.lane.b32.xlu0 %v188, 2
    %v711 = vpop.permute.xlu0 %710
    %712 = vrot.lane.b32.xlu0 %v189, 2
    %v713 = vpop.permute.xlu0 %712
    %714 = vrot.lane.b32.xlu0 %v190, 2
    %v715 = vpop.permute.xlu0 %714
    %716 = vrot.lane.b32.xlu0 %v191, 2
    %v717 = vpop.permute.xlu0 %716
    %718 = vrot.lane.b32.xlu0 %v192, 2
    %v719 = vpop.permute.xlu0 %718
    %720 = vrot.lane.b32.xlu0 %v193, 2
    %v721 = vpop.permute.xlu0 %720
    %722 = vrot.lane.b32.xlu0 %v194, 2
    %v723 = vpop.permute.xlu0 %722
    %724 = vrot.lane.b32.xlu0 %v195, 2
    %v725 = vpop.permute.xlu0 %724
    %726 = vrot.lane.b32.xlu0 %v196, 2
    %v727 = vpop.permute.xlu0 %726
    %728 = vrot.lane.b32.xlu0 %v197, 2
    %v729 = vpop.permute.xlu0 %728
    %730 = vrot.lane.b32.xlu0 %v198, 2
    %v731 = vpop.permute.xlu0 %730
    %732 = vrot.lane.b32.xlu0 %v199, 2
    %v733 = vpop.permute.xlu0 %732
    %734 = vrot.lane.b32.xlu0 %v200, 2
    %v735 = vpop.permute.xlu0 %734
    %736 = vrot.lane.b32.xlu0 %v201, 2
    %v737 = vpop.permute.xlu0 %736
    %738 = vrot.lane.b32.xlu0 %v202, 2
    %v739 = vpop.permute.xlu0 %738
    %740 = vrot.lane.b32.xlu0 %v203, 2
    %v741 = vpop.permute.xlu0 %740
    %742 = vrot.lane.b32.xlu0 %v204, 2
    %v743 = vpop.permute.xlu0 %742
    %744 = vrot.lane.b32.xlu0 %v205, 2
    %v745 = vpop.permute.xlu0 %744
    %746 = vrot.lane.b32.xlu0 %v206, 2
    %v747 = vpop.permute.xlu0 %746
    %748 = vrot.lane.b32.xlu0 %v207, 2
    %v749 = vpop.permute.xlu0 %748
    %750 = vrot.lane.b32.xlu0 %v208, 2
    %v751 = vpop.permute.xlu0 %750
    %752 = vrot.lane.b32.xlu0 %v209, 2
    %v753 = vpop.permute.xlu0 %752
    %v786 = vmul.f32 %v146, %v691
    %v787 = vmul.f32 %v146, %v693
    %v788 = vmul.f32 %v147, %v695
    %v789 = vmul.f32 %v147, %v697
    %v790 = vmul.f32 %v148, %v699
    %v791 = vmul.f32 %v148, %v701
    %v792 = vmul.f32 %v149, %v703
    %v793 = vmul.f32 %v149, %v705
    %v794 = vmul.f32 %v150, %v707
    %v795 = vmul.f32 %v150, %v709
    %v796 = vmul.f32 %v151, %v711
    %v797 = vmul.f32 %v151, %v713
    %v798 = vmul.f32 %v152, %v715
    %v799 = vmul.f32 %v152, %v717
    %v800 = vmul.f32 %v153, %v719
    %v801 = vmul.f32 %v153, %v721
    %v802 = vmul.f32 %v154, %v723
    %v803 = vmul.f32 %v154, %v725
    %v804 = vmul.f32 %v155, %v727
    %v805 = vmul.f32 %v155, %v729
    %v806 = vmul.f32 %v156, %v731
    %v807 = vmul.f32 %v156, %v733
    %v808 = vmul.f32 %v157, %v735
    %v809 = vmul.f32 %v157, %v737
    %v810 = vmul.f32 %v158, %v739
    %v811 = vmul.f32 %v158, %v741
    %v812 = vmul.f32 %v159, %v743
    %v813 = vmul.f32 %v159, %v745
    %v814 = vmul.f32 %v160, %v747
    %v815 = vmul.f32 %v160, %v749
    %v816 = vmul.f32 %v161, %v751
    %v817 = vmul.f32 %v161, %v753
    %v818 = vmul.f32 %v786, %v691
    %v819 = vmul.f32 %v787, %v693
    %v820 = vmul.f32 %v788, %v695
    %v821 = vmul.f32 %v789, %v697
    %v822 = vmul.f32 %v790, %v699
    %v823 = vmul.f32 %v791, %v701
    %v824 = vmul.f32 %v792, %v703
    %v825 = vmul.f32 %v793, %v705
    %v826 = vmul.f32 %v794, %v707
    %v827 = vmul.f32 %v795, %v709
    %v828 = vmul.f32 %v796, %v711
    %v829 = vmul.f32 %v797, %v713
    %v830 = vmul.f32 %v798, %v715
    %v831 = vmul.f32 %v799, %v717
    %v832 = vmul.f32 %v800, %v719
    %v833 = vmul.f32 %v801, %v721
    %v834 = vmul.f32 %v802, %v723
    %v835 = vmul.f32 %v803, %v725
    %v836 = vmul.f32 %v804, %v727
    %v837 = vmul.f32 %v805, %v729
    %v838 = vmul.f32 %v806, %v731
    %v839 = vmul.f32 %v807, %v733
    %v840 = vmul.f32 %v808, %v735
    %v841 = vmul.f32 %v809, %v737
    %v842 = vmul.f32 %v810, %v739
    %v843 = vmul.f32 %v811, %v741
    %v844 = vmul.f32 %v812, %v743
    %v845 = vmul.f32 %v813, %v745
    %v846 = vmul.f32 %v814, %v747
    %v847 = vmul.f32 %v815, %v749
    %v848 = vmul.f32 %v816, %v751
    %v849 = vmul.f32 %v817, %v753
    %851 = vset.pattern.permute.xlu0 3
    %852 = vperm.xlu0 %851, %v818
    %v853 = vpop.permute.xlu0 %852
    %856 = vset.pattern.permute.xlu0 3
    %857 = vperm.xlu0 %856, %v819
    %v858 = vpop.permute.xlu0 %857
    %861 = vset.pattern.permute.xlu0 3
    %862 = vperm.xlu0 %861, %v820
    %v863 = vpop.permute.xlu0 %862
    %866 = vset.pattern.permute.xlu0 3
    %867 = vperm.xlu0 %866, %v821
    %v868 = vpop.permute.xlu0 %867
    %871 = vset.pattern.permute.xlu0 3
    %872 = vperm.xlu0 %871, %v822
    %v873 = vpop.permute.xlu0 %872
    %876 = vset.pattern.permute.xlu0 3
    %877 = vperm.xlu0 %876, %v823
    %v878 = vpop.permute.xlu0 %877
    %881 = vset.pattern.permute.xlu0 3
    %882 = vperm.xlu0 %881, %v824
    %v883 = vpop.permute.xlu0 %882
    %886 = vset.pattern.permute.xlu0 3
    %887 = vperm.xlu0 %886, %v825
    %v888 = vpop.permute.xlu0 %887
    %891 = vset.pattern.permute.xlu0 3
    %892 = vperm.xlu0 %891, %v826
    %v893 = vpop.permute.xlu0 %892
    %896 = vset.pattern.permute.xlu0 3
    %897 = vperm.xlu0 %896, %v827
    %v898 = vpop.permute.xlu0 %897
    %901 = vset.pattern.permute.xlu0 3
    %902 = vperm.xlu0 %901, %v828
    %v903 = vpop.permute.xlu0 %902
    %906 = vset.pattern.permute.xlu0 3
    %907 = vperm.xlu0 %906, %v829
    %v908 = vpop.permute.xlu0 %907
    %911 = vset.pattern.permute.xlu0 3
    %912 = vperm.xlu0 %911, %v830
    %v913 = vpop.permute.xlu0 %912
    %916 = vset.pattern.permute.xlu0 3
    %917 = vperm.xlu0 %916, %v831
    %v918 = vpop.permute.xlu0 %917
    %921 = vset.pattern.permute.xlu0 3
    %922 = vperm.xlu0 %921, %v832
    %v923 = vpop.permute.xlu0 %922
    %926 = vset.pattern.permute.xlu0 3
    %927 = vperm.xlu0 %926, %v833
    %v928 = vpop.permute.xlu0 %927
    %931 = vset.pattern.permute.xlu0 3
    %932 = vperm.xlu0 %931, %v834
    %v933 = vpop.permute.xlu0 %932
    %936 = vset.pattern.permute.xlu0 3
    %937 = vperm.xlu0 %936, %v835
    %v938 = vpop.permute.xlu0 %937
    %941 = vset.pattern.permute.xlu0 3
    %942 = vperm.xlu0 %941, %v836
    %v943 = vpop.permute.xlu0 %942
    %946 = vset.pattern.permute.xlu0 3
    %947 = vperm.xlu0 %946, %v837
    %v948 = vpop.permute.xlu0 %947
    %951 = vset.pattern.permute.xlu0 3
    %952 = vperm.xlu0 %951, %v838
    %v953 = vpop.permute.xlu0 %952
    %956 = vset.pattern.permute.xlu0 3
    %957 = vperm.xlu0 %956, %v839
    %v958 = vpop.permute.xlu0 %957
    %961 = vset.pattern.permute.xlu0 3
    %962 = vperm.xlu0 %961, %v840
    %v963 = vpop.permute.xlu0 %962
    %966 = vset.pattern.permute.xlu0 3
    %967 = vperm.xlu0 %966, %v841
    %v968 = vpop.permute.xlu0 %967
    %971 = vset.pattern.permute.xlu0 3
    %972 = vperm.xlu0 %971, %v842
    %v973 = vpop.permute.xlu0 %972
    %976 = vset.pattern.permute.xlu0 3
    %977 = vperm.xlu0 %976, %v843
    %v978 = vpop.permute.xlu0 %977
    %981 = vset.pattern.permute.xlu0 3
    %982 = vperm.xlu0 %981, %v844
    %v983 = vpop.permute.xlu0 %982
    %986 = vset.pattern.permute.xlu0 3
    %987 = vperm.xlu0 %986, %v845
    %v988 = vpop.permute.xlu0 %987
    %991 = vset.pattern.permute.xlu0 3
    %992 = vperm.xlu0 %991, %v846
    %v993 = vpop.permute.xlu0 %992
    %996 = vset.pattern.permute.xlu0 3
    %997 = vperm.xlu0 %996, %v847
    %v998 = vpop.permute.xlu0 %997
    %1001 = vset.pattern.permute.xlu0 3
    %1002 = vperm.xlu0 %1001, %v848
    %v1003 = vpop.permute.xlu0 %1002
    %1006 = vset.pattern.permute.xlu0 3
    %1007 = vperm.xlu0 %1006, %v849
    %v1008 = vpop.permute.xlu0 %1007
    %v1010 = vadd.f32 %v658, %v853
    %v1011 = vadd.f32 %v659, %v858
    %v1012 = vadd.f32 %v660, %v863
    %v1013 = vadd.f32 %v661, %v868
    %v1014 = vadd.f32 %v662, %v873
    %v1015 = vadd.f32 %v663, %v878
    %v1016 = vadd.f32 %v664, %v883
    %v1017 = vadd.f32 %v665, %v888
    %v1018 = vadd.f32 %v666, %v893
    %v1019 = vadd.f32 %v667, %v898
    %v1020 = vadd.f32 %v668, %v903
    %v1021 = vadd.f32 %v669, %v908
    %v1022 = vadd.f32 %v670, %v913
    %v1023 = vadd.f32 %v671, %v918
    %v1024 = vadd.f32 %v672, %v923
    %v1025 = vadd.f32 %v673, %v928
    %v1026 = vadd.f32 %v674, %v933
    %v1027 = vadd.f32 %v675, %v938
    %v1028 = vadd.f32 %v676, %v943
    %v1029 = vadd.f32 %v677, %v948
    %v1030 = vadd.f32 %v678, %v953
    %v1031 = vadd.f32 %v679, %v958
    %v1032 = vadd.f32 %v680, %v963
    %v1033 = vadd.f32 %v681, %v968
    %v1034 = vadd.f32 %v682, %v973
    %v1035 = vadd.f32 %v683, %v978
    %v1036 = vadd.f32 %v684, %v983
    %v1037 = vadd.f32 %v685, %v988
    %v1038 = vadd.f32 %v686, %v993
    %v1039 = vadd.f32 %v687, %v998
    %v1040 = vadd.f32 %v688, %v1003
    %v1041 = vadd.f32 %v689, %v1008
    %v1042 = vmul.f32 %v1010, 1.442695
    %v1043 = vpow.pop %v1042
    %v1044 = vmul.f32 %v1011, 1.442695
    %v1045 = vpow.pop %v1044
    %v1046 = vmul.f32 %v1012, 1.442695
    %v1047 = vpow.pop %v1046
    %v1048 = vmul.f32 %v1013, 1.442695
    %v1049 = vpow.pop %v1048
    %v1050 = vmul.f32 %v1014, 1.442695
    %v1051 = vpow.pop %v1050
    %v1052 = vmul.f32 %v1015, 1.442695
    %v1053 = vpow.pop %v1052
    %v1054 = vmul.f32 %v1016, 1.442695
    %v1055 = vpow.pop %v1054
    %v1056 = vmul.f32 %v1017, 1.442695
    %v1057 = vpow.pop %v1056
    %v1058 = vmul.f32 %v1018, 1.442695
    %v1059 = vpow.pop %v1058
    %v1060 = vmul.f32 %v1019, 1.442695
    %v1061 = vpow.pop %v1060
    %v1062 = vmul.f32 %v1020, 1.442695
    %v1063 = vpow.pop %v1062
    %v1064 = vmul.f32 %v1021, 1.442695
    %v1065 = vpow.pop %v1064
    %v1066 = vmul.f32 %v1022, 1.442695
    %v1067 = vpow.pop %v1066
    %v1068 = vmul.f32 %v1023, 1.442695
    %v1069 = vpow.pop %v1068
    %v1070 = vmul.f32 %v1024, 1.442695
    %v1071 = vpow.pop %v1070
    %v1072 = vmul.f32 %v1025, 1.442695
    %v1073 = vpow.pop %v1072
    %v1074 = vmul.f32 %v1026, 1.442695
    %v1075 = vpow.pop %v1074
    %v1076 = vmul.f32 %v1027, 1.442695
    %v1077 = vpow.pop %v1076
    %v1078 = vmul.f32 %v1028, 1.442695
    %v1079 = vpow.pop %v1078
    %v1080 = vmul.f32 %v1029, 1.442695
    %v1081 = vpow.pop %v1080
    %v1082 = vmul.f32 %v1030, 1.442695
    %v1083 = vpow.pop %v1082
    %v1084 = vmul.f32 %v1031, 1.442695
    %v1085 = vpow.pop %v1084
    %v1086 = vmul.f32 %v1032, 1.442695
    %v1087 = vpow.pop %v1086
    %v1088 = vmul.f32 %v1033, 1.442695
    %v1089 = vpow.pop %v1088
    %v1090 = vmul.f32 %v1034, 1.442695
    %v1091 = vpow.pop %v1090
    %v1092 = vmul.f32 %v1035, 1.442695
    %v1093 = vpow.pop %v1092
    %v1094 = vmul.f32 %v1036, 1.442695
    %v1095 = vpow.pop %v1094
    %v1096 = vmul.f32 %v1037, 1.442695
    %v1097 = vpow.pop %v1096
    %v1098 = vmul.f32 %v1038, 1.442695
    %v1099 = vpow.pop %v1098
    %v1100 = vmul.f32 %v1039, 1.442695
    %v1101 = vpow.pop %v1100
    %v1102 = vmul.f32 %v1040, 1.442695
    %v1103 = vpow.pop %v1102
    %v1104 = vmul.f32 %v1041, 1.442695
    %v1105 = vpow.pop %v1104
    %1106 = vset.pattern.permute.xlu0 5
    %1107 = vperm.xlu0 %1106, %v146
    %v1108 = vpop.permute.xlu0 %1107
    %1110 = vset.pattern.permute.xlu0 5
    %1111 = vperm.xlu0 %1110, %v147
    %v1112 = vpop.permute.xlu0 %1111
    %1114 = vset.pattern.permute.xlu0 5
    %1115 = vperm.xlu0 %1114, %v148
    %v1116 = vpop.permute.xlu0 %1115
    %1118 = vset.pattern.permute.xlu0 5
    %1119 = vperm.xlu0 %1118, %v149
    %v1120 = vpop.permute.xlu0 %1119
    %1122 = vset.pattern.permute.xlu0 5
    %1123 = vperm.xlu0 %1122, %v150
    %v1124 = vpop.permute.xlu0 %1123
    %1126 = vset.pattern.permute.xlu0 5
    %1127 = vperm.xlu0 %1126, %v151
    %v1128 = vpop.permute.xlu0 %1127
    %1130 = vset.pattern.permute.xlu0 5
    %1131 = vperm.xlu0 %1130, %v152
    %v1132 = vpop.permute.xlu0 %1131
    %1134 = vset.pattern.permute.xlu0 5
    %1135 = vperm.xlu0 %1134, %v153
    %v1136 = vpop.permute.xlu0 %1135
    %1138 = vset.pattern.permute.xlu0 5
    %1139 = vperm.xlu0 %1138, %v154
    %v1140 = vpop.permute.xlu0 %1139
    %1142 = vset.pattern.permute.xlu0 5
    %1143 = vperm.xlu0 %1142, %v155
    %v1144 = vpop.permute.xlu0 %1143
    %1146 = vset.pattern.permute.xlu0 5
    %1147 = vperm.xlu0 %1146, %v156
    %v1148 = vpop.permute.xlu0 %1147
    %1150 = vset.pattern.permute.xlu0 5
    %1151 = vperm.xlu0 %1150, %v157
    %v1152 = vpop.permute.xlu0 %1151
    %1154 = vset.pattern.permute.xlu0 5
    %1155 = vperm.xlu0 %1154, %v158
    %v1156 = vpop.permute.xlu0 %1155
    %1158 = vset.pattern.permute.xlu0 5
    %1159 = vperm.xlu0 %1158, %v159
    %v1160 = vpop.permute.xlu0 %1159
    %1162 = vset.pattern.permute.xlu0 5
    %1163 = vperm.xlu0 %1162, %v160
    %v1164 = vpop.permute.xlu0 %1163
    %1166 = vset.pattern.permute.xlu0 5
    %1167 = vperm.xlu0 %1166, %v161
    %v1168 = vpop.permute.xlu0 %1167
    %v1170 = vmul.f32 %v1108, %v1043
    %v1171 = vmul.f32 %v1108, %v1045
    %v1172 = vmul.f32 %v1112, %v1047
    %v1173 = vmul.f32 %v1112, %v1049
    %v1174 = vmul.f32 %v1116, %v1051
    %v1175 = vmul.f32 %v1116, %v1053
    %v1176 = vmul.f32 %v1120, %v1055
    %v1177 = vmul.f32 %v1120, %v1057
    %v1178 = vmul.f32 %v1124, %v1059
    %v1179 = vmul.f32 %v1124, %v1061
    %v1180 = vmul.f32 %v1128, %v1063
    %v1181 = vmul.f32 %v1128, %v1065
    %v1182 = vmul.f32 %v1132, %v1067
    %v1183 = vmul.f32 %v1132, %v1069
    %v1184 = vmul.f32 %v1136, %v1071
    %v1185 = vmul.f32 %v1136, %v1073
    %v1186 = vmul.f32 %v1140, %v1075
    %v1187 = vmul.f32 %v1140, %v1077
    %v1188 = vmul.f32 %v1144, %v1079
    %v1189 = vmul.f32 %v1144, %v1081
    %v1190 = vmul.f32 %v1148, %v1083
    %v1191 = vmul.f32 %v1148, %v1085
    %v1192 = vmul.f32 %v1152, %v1087
    %v1193 = vmul.f32 %v1152, %v1089
    %v1194 = vmul.f32 %v1156, %v1091
    %v1195 = vmul.f32 %v1156, %v1093
    %v1196 = vmul.f32 %v1160, %v1095
    %v1197 = vmul.f32 %v1160, %v1097
    %v1198 = vmul.f32 %v1164, %v1099
    %v1199 = vmul.f32 %v1164, %v1101
    %v1200 = vmul.f32 %v1168, %v1103
    %v1201 = vmul.f32 %v1168, %v1105
    %vm1202 = vcmask 130048
    %v1203 = vsel %vm1202, %v1170, 0.0
    %v1204 = vsel %vm1202, %v1172, 0.0
    %v1205 = vadd.f32 %v1203, %v1204
    %v1206 = vsel %vm1202, %v1174, 0.0
    %v1207 = vadd.f32 %v1205, %v1206
    %v1208 = vsel %vm1202, %v1176, 0.0
    %v1209 = vadd.f32 %v1207, %v1208
    %v1210 = vsel %vm1202, %v1178, 0.0
    %v1211 = vadd.f32 %v1209, %v1210
    %v1212 = vsel %vm1202, %v1180, 0.0
    %v1213 = vadd.f32 %v1211, %v1212
    %v1214 = vsel %vm1202, %v1182, 0.0
    %v1215 = vadd.f32 %v1213, %v1214
    %v1216 = vsel %vm1202, %v1184, 0.0
    %v1217 = vadd.f32 %v1215, %v1216
    %v1218 = vsel %vm1202, %v1171, 0.0
    %v1219 = vsel %vm1202, %v1173, 0.0
    %v1220 = vadd.f32 %v1218, %v1219
    %v1221 = vsel %vm1202, %v1175, 0.0
    %v1222 = vadd.f32 %v1220, %v1221
    %v1223 = vsel %vm1202, %v1177, 0.0
    %v1224 = vadd.f32 %v1222, %v1223
    %v1225 = vsel %vm1202, %v1179, 0.0
    %v1226 = vadd.f32 %v1224, %v1225
    %v1227 = vsel %vm1202, %v1181, 0.0
    %v1228 = vadd.f32 %v1226, %v1227
    %v1229 = vsel %vm1202, %v1183, 0.0
    %v1230 = vadd.f32 %v1228, %v1229
    %v1231 = vsel %vm1202, %v1185, 0.0
    %v1232 = vadd.f32 %v1230, %v1231
    %v1233 = vsel %vm1202, %v1186, 0.0
    %v1234 = vsel %vm1202, %v1188, 0.0
    %v1235 = vadd.f32 %v1233, %v1234
    %v1236 = vsel %vm1202, %v1190, 0.0
    %v1237 = vadd.f32 %v1235, %v1236
    %v1238 = vsel %vm1202, %v1192, 0.0
    %v1239 = vadd.f32 %v1237, %v1238
    %v1240 = vsel %vm1202, %v1194, 0.0
    %v1241 = vadd.f32 %v1239, %v1240
    %v1242 = vsel %vm1202, %v1196, 0.0
    %v1243 = vadd.f32 %v1241, %v1242
    %v1244 = vsel %vm1202, %v1198, 0.0
    %v1245 = vadd.f32 %v1243, %v1244
    %v1246 = vsel %vm1202, %v1200, 0.0
    %v1247 = vadd.f32 %v1245, %v1246
    %v1248 = vsel %vm1202, %v1187, 0.0
    %v1249 = vsel %vm1202, %v1189, 0.0
    %v1250 = vadd.f32 %v1248, %v1249
    %v1251 = vsel %vm1202, %v1191, 0.0
    %v1252 = vadd.f32 %v1250, %v1251
    %v1253 = vsel %vm1202, %v1193, 0.0
    %v1254 = vadd.f32 %v1252, %v1253
    %v1255 = vsel %vm1202, %v1195, 0.0
    %v1256 = vadd.f32 %v1254, %v1255
    %v1257 = vsel %vm1202, %v1197, 0.0
    %v1258 = vadd.f32 %v1256, %v1257
    %v1259 = vsel %vm1202, %v1199, 0.0
    %v1260 = vadd.f32 %v1258, %v1259
    %v1261 = vsel %vm1202, %v1201, 0.0
    %v1262 = vadd.f32 %v1260, %v1261
    %v1263 = vxor.u32 %v1217, 2147483648
    %v1264 = vxor.u32 %v1232, 2147483648
    %v1265 = vxor.u32 %v1247, 2147483648
    %v1266 = vxor.u32 %v1262, 2147483648
    %v1267 = vmul.f32 %v1263, 1.442695
    %v1268 = vpow.pop %v1267
    %v1269 = vmul.f32 %v1264, 1.442695
    %v1270 = vpow.pop %v1269
    %v1271 = vmul.f32 %v1265, 1.442695
    %v1272 = vpow.pop %v1271
    %v1273 = vmul.f32 %v1266, 1.442695
    %v1274 = vpow.pop %v1273
    %v1275 = vadd.f32 %v1268, 1.0
    %v1276 = vadd.f32 %v1270, 1.0
    %v1277 = vadd.f32 %v1272, 1.0
    %v1278 = vadd.f32 %v1274, 1.0
    %v1279 = vrcp.pop %v1275
    %v1280 = vmul.f32 %v1275, %v1279
    %v1281 = vsub.f32 1.0, %v1280
    %v1282 = vmul.f32 %v1279, %v1281
    %v1283 = vadd.f32 %v1279, %v1282
    %vm1284 = vweird.f32 %v1275
    %vm1285 = vweird.f32 %v1279
    %vm1286 = vmor %vm1284, %vm1285
    %v1287 = vsel %vm1286, %v1279, %v1283
    %v1288 = vand.u32 2147483647, %v1275
    %vm1289 = vcmp.eq.f32.partialorder %v1288, 8.507059e+37
    %v1290 = vand.u32 %v1275, 2147483648
    %v1291 = vor.u32 1.1754944e-38, %v1290
    %v1292 = vsel %vm1289, %v1291, %v1287
    %v1293 = vmul.f32 1.0, %v1292
    %v1294 = vrcp.pop %v1276
    %v1295 = vmul.f32 %v1276, %v1294
    %v1296 = vsub.f32 1.0, %v1295
    %v1297 = vmul.f32 %v1294, %v1296
    %v1298 = vadd.f32 %v1294, %v1297
    %vm1299 = vweird.f32 %v1276
    %vm1300 = vweird.f32 %v1294
    %vm1301 = vmor %vm1299, %vm1300
    %v1302 = vsel %vm1301, %v1294, %v1298
    %v1303 = vand.u32 2147483647, %v1276
    %vm1304 = vcmp.eq.f32.partialorder %v1303, 8.507059e+37
    %v1305 = vand.u32 %v1276, 2147483648
    %v1306 = vor.u32 1.1754944e-38, %v1305
    %v1307 = vsel %vm1304, %v1306, %v1302
    %v1308 = vmul.f32 1.0, %v1307
    %v1309 = vrcp.pop %v1277
    %v1310 = vmul.f32 %v1277, %v1309
    %v1311 = vsub.f32 1.0, %v1310
    %v1312 = vmul.f32 %v1309, %v1311
    %v1313 = vadd.f32 %v1309, %v1312
    %vm1314 = vweird.f32 %v1277
    %vm1315 = vweird.f32 %v1309
    %vm1316 = vmor %vm1314, %vm1315
    %v1317 = vsel %vm1316, %v1309, %v1313
    %v1318 = vand.u32 2147483647, %v1277
    %vm1319 = vcmp.eq.f32.partialorder %v1318, 8.507059e+37
    %v1320 = vand.u32 %v1277, 2147483648
    %v1321 = vor.u32 1.1754944e-38, %v1320
    %v1322 = vsel %vm1319, %v1321, %v1317
    %v1323 = vmul.f32 1.0, %v1322
    %v1324 = vrcp.pop %v1278
    %v1325 = vmul.f32 %v1278, %v1324
    %v1326 = vsub.f32 1.0, %v1325
    %v1327 = vmul.f32 %v1324, %v1326
    %v1328 = vadd.f32 %v1324, %v1327
    %vm1329 = vweird.f32 %v1278
    %vm1330 = vweird.f32 %v1324
    %vm1331 = vmor %vm1329, %vm1330
    %v1332 = vsel %vm1331, %v1324, %v1328
    %v1333 = vand.u32 2147483647, %v1278
    %vm1334 = vcmp.eq.f32.partialorder %v1333, 8.507059e+37
    %v1335 = vand.u32 %v1278, 2147483648
    %v1336 = vor.u32 1.1754944e-38, %v1335
    %v1337 = vsel %vm1334, %v1336, %v1332
    %v1338 = vmul.f32 1.0, %v1337
    %1339 = vst.msk [vmem:[#allocation2] sm:$0xff] %vm1202, %v1293
    %1340 = vst.msk [vmem:[#allocation2 + $0x8] sm:$0xff] %vm1202, %v1308
    %1341 = vst.msk [vmem:[#allocation2 + $0x10] sm:$0xff] %vm1202, %v1323
    %1342 = vst.msk [vmem:[#allocation2 + $0x18] sm:$0xff] %vm1202, %v1338
    // Predicated region
    $region6: #{tpu_custom_call.1} parent=1 // pred_check
      _
    $region7: #{tpu_custom_call.1} parent=1 // pred_check_branch
      %1344 = sbr.rel (0) target = $region9
    $region8: #{tpu_custom_call.1} parent=1 // pred_region
      %1346 = vsyncadd [#allocation3], 0
      %s1347 = sshll.u32 [#allocation2], 4
      %s1348 = int_to_ptr.vmem [resolvable:$true] %s1347
      %s1349 = sshll.u32 %s1, 4
      %s1350 = int_to_ptr.hbm [resolvable:$true] %s1349
      %1355 = dma.vmem_to_hbm [thread:$0]  %s1348, 512, %s1350, [#allocation3], 128, 128, 8
    $region9: #{tpu_custom_call.1} parent=1 // pred_fallthru
      _
    // Predicated region
    $region10: #{tpu_custom_call.1} parent=1 // pred_check
      _
    $region11: #{tpu_custom_call.1} parent=1 // pred_check_branch
      %1357 = sbr.rel (0) target = $region13
    $region12: #{tpu_custom_call.1} parent=1 // pred_region
      %1359 = dma.done [#allocation3], 512
    $region13: #{tpu_custom_call.1} parent=1 // pred_fallthru
      _
    %1360 = vsyncpa [#allocation3], 1

</llo_original>
